<compile_context>
chip_gen: v7x
topology: tpu7x:2x2x1
jax: 0.10.0
libtpu: 0.0.40
codegen_flags: <defaults>
</compile_context>

<pallas_src>
import jax
import jax.numpy as jnp
from jax.experimental import pallas as pl
from jax.experimental.pallas import tpu as pltpu


def _round_up(a, b):
    return (a + b - 1) // b * b


def _wav2vec_att_pool_kernel(x_ref, w_att_ref, w1_ref, b1_ref, w2_ref, b2_ref,
                             out_ref, pooled_ref):
    """Grid = (N-blocks, Dh-blocks).  One N-block of rows per outer step."""
    dh = pl.program_id(1)

    # --- SelfAttentionPooling (once per N-block, at the first Dh step) ---
    @pl.when(dh == 0)
    def _():
        x = x_ref[...]                                          # (NB, T, H) f32
        # Attention scores on the VPU/XLU (broadcast-mul + lane reduce).
        # b_att is omitted: a constant added before softmax cancels exactly.
        scores = jnp.sum(x * w_att_ref[...], axis=-1)           # (NB, T)

        # Numerically-stable softmax over T.
        m = jnp.max(scores, axis=-1, keepdims=True)             # (NB, 1)
        e = jnp.exp(scores - m)                                 # (NB, T)
        denom = jnp.sum(e, axis=-1, keepdims=True)              # (NB, 1)
        inv = pl.reciprocal(denom, approx=True)                 # EUP slot
        inv = inv * (2.0 - denom * inv)                         # Newton refine
        att_w = e * inv                                         # (NB, T)

        # Weighted sum over time -> (NB, H); cast once to bf16 for the MXU.
        pooled = jnp.sum(x * att_w[:, :, None], axis=1)         # (NB, H) f32
        pooled_ref[...] = pooled.astype(jnp.bfloat16)

        # Init the output accumulator with the final bias b2 (SMEM scalar).
        out_ref[...] = jnp.zeros(out_ref.shape, out_ref.dtype) + b2_ref[0, 0]

    # --- dense head chunk: Linear(H, TDh) -> ReLU -> (Dropout=id) -> readout ---
    h = jnp.dot(pooled_ref[...], w1_ref[...],
                preferred_element_type=jnp.float32) + b1_ref[...]   # (NB, TDh) MXU
    h = jnp.maximum(h, 0.0)

    # Partial (TDh -> 1) projection on the VPU/XLU: w2 chunk is lane-dense.
    out_ref[...] += jnp.sum(h * w2_ref[...], axis=-1, keepdims=True)  # (NB, 1)


def wav2vec_attention_pooling(x, params, *, block_n=128, block_dh=1024,
                              x_vmem_budget_bytes=16 << 20):
    """x: (N, T, H) float32. Returns (N, 1) float32 (eval-mode forward)."""
    x = x.astype(jnp.float32)
    N, T, H = x.shape
    Dh = params["w1"].shape[1]

    # Batch-row block: multiple of 8 (sublanes), at most block_n (MXU rows),
    # and small enough that the double-buffered (NB, T, H) f32 x block fits
    # the VMEM budget for realistic (T, H).
    per_row_bytes = 2 * T * H * 4                   # 2 pipeline buffers, f32
    nb_budget = max(8, (x_vmem_budget_bytes // per_row_bytes) // 8 * 8)
    NB = int(min(block_n, nb_budget, _round_up(N, 8)))
    N_pad = _round_up(N, NB)
    if N_pad != N:
        # Zero padding is safe: padded rows give a uniform softmax over zeros,
        # pooled == 0, and a finite relu(b1)-path output that is sliced off.
        x = jnp.pad(x, ((0, N_pad - N), (0, 0), (0, 0)))

    # Dh tiling for the dense head (streams w1/b1/w2 in chunks).
    TDh = int(min(block_dh, Dh))
    assert Dh % TDh == 0, (Dh, TDh)
    n_dh = Dh // TDh

    w_att = params["w_att"].reshape(1, 1, H).astype(jnp.float32)
    w1_bf16 = params["w1"].astype(jnp.bfloat16)     # MXU operand in bf16
    b1 = params["b1"].astype(jnp.float32)
    w2 = params["w2"].astype(jnp.float32)
    b2 = params["b2"].astype(jnp.float32)

    grid_spec = pltpu.PrefetchScalarGridSpec(
        num_scalar_prefetch=0,
        grid=(N_pad // NB, n_dh),                   # (parallel N, arbitrary Dh)
        in_specs=[
            pl.BlockSpec((NB, T, H), lambda i, j: (i, 0, 0)),   # x (const over j)
            pl.BlockSpec((1, 1, H), lambda i, j: (0, 0, 0)),    # w_att (lane-dense)
            pl.BlockSpec((H, TDh), lambda i, j: (0, j)),        # w1 chunk (bf16)
            pl.BlockSpec((1, TDh), lambda i, j: (0, j)),        # b1 chunk
            pl.BlockSpec((1, TDh), lambda i, j: (0, j)),        # w2 chunk (lane-dense)
            pl.BlockSpec(memory_space=pltpu.MemorySpace.SMEM),  # b2 scalar
        ],
        out_specs=pl.BlockSpec((NB, 1), lambda i, j: (i, 0)),   # resident over j
        scratch_shapes=[
            pltpu.VMEM((NB, H), jnp.bfloat16),                  # pooled (persists over Dh)
        ],
    )

    out = pl.pallas_call(
        _wav2vec_att_pool_kernel,
        out_shape=jax.ShapeDtypeStruct((N_pad, 1), jnp.float32),
        grid_spec=grid_spec,
        compiler_params=pltpu.CompilerParams(
            dimension_semantics=("parallel", "arbitrary"),
            vmem_limit_bytes=48 * 1024 * 1024,
        ),
    )(x, w_att, w1_bf16, b1, w2, b2)

    return out[:N]


def init_params(key, input_dim, hidden_dim=4096):
    """Deterministic synthetic parameters (shapes match the PyTorch module)."""
    k = jax.random.split(key, 6)
    scale_att = 1.0 / jnp.sqrt(input_dim)
    scale_1 = 1.0 / jnp.sqrt(input_dim)
    scale_2 = 1.0 / jnp.sqrt(hidden_dim)
    return {
        # SelfAttentionPooling.W : Linear(input_dim, 1) -> weight (1, input_dim)
        "w_att": jax.random.uniform(k[0], (1, input_dim), jnp.float32,
                                    -scale_att, scale_att),
        "b_att": jax.random.uniform(k[1], (1, 1), jnp.float32,
                                    -scale_att, scale_att),
        # dense[0] : Linear(input_dim, 4096) -> stored transposed (in, out)
        "w1": jax.random.uniform(k[2], (input_dim, hidden_dim), jnp.float32,
                                 -scale_1, scale_1),
        "b1": jax.random.uniform(k[3], (1, hidden_dim), jnp.float32,
                                 -scale_1, scale_1),
        # dense[3] : Linear(4096, 1) -> weight (1, 4096)
        "w2": jax.random.uniform(k[4], (1, hidden_dim), jnp.float32,
                                 -scale_2, scale_2),
        "b2": jax.random.uniform(k[5], (1, 1), jnp.float32,
                                 -scale_2, scale_2),
    }


def reference_forward(x, p):
    """Pure-JAX f32 reference (eval mode: dropout = identity)."""
    scores = jnp.einsum("nth,h->nt", x, p["w_att"][0]) + p["b_att"][0, 0]  # (N,T)
    att_w = jax.nn.softmax(scores, axis=1)[..., None]                       # (N,T,1)
    pooled = jnp.sum(x * att_w, axis=1)                                     # (N,H)
    h = jax.nn.relu(pooled @ p["w1"] + p["b1"])                             # (N,Dh)
    return jnp.sum(h * p["w2"], axis=-1, keepdims=True) + p["b2"][0, 0]     # (N,1)


if __name__ == "__main__":
    key = jax.random.PRNGKey(0)
    k_x, k_p = jax.random.split(key)

    N, T, H = 2, 8, 32          # small shapes consistent with (N, T, H) input
    HIDDEN = 4096               # dense hidden size is fixed by the module

    x = jax.random.normal(k_x, (N, T, H), dtype=jnp.float32)
    params = init_params(k_p, input_dim=H, hidden_dim=HIDDEN)

    out = wav2vec_attention_pooling(x, params)
    out = jax.block_until_ready(out)

    ref = reference_forward(x, params)
    assert out.shape == (N, 1)
    # Tolerance accounts for bf16 MXU operands (pooled, w1) vs. the f32
    # reference; the softmax reciprocal itself is Newton-refined to ~f32 exact.
    assert jnp.allclose(out, ref, atol=3e-2, rtol=3e-2), (out, ref)

    print("KERNEL_OK")
</pallas_src>

<mosaic_0001>
module attributes {stable_mosaic.version = 11 : i64} {
  func.func @_wav2vec_att_pool_kernel(%arg0: i32, %arg1: i32, %arg2: memref<8x8x32xf32, #tpu.memory_space<vmem>>, %arg3: memref<1x1x32xf32, #tpu.memory_space<vmem>>, %arg4: memref<32x1024xbf16, #tpu.memory_space<vmem>>, %arg5: memref<1x1024xf32, #tpu.memory_space<vmem>>, %arg6: memref<1x1024xf32, #tpu.memory_space<vmem>>, %arg7: memref<1x1xf32, #tpu.memory_space<smem>>, %arg8: memref<8x1xf32, #tpu.memory_space<vmem>>, %arg9: memref<8x32xbf16, #tpu.memory_space<vmem>>) attributes {dimension_semantics = [#tpu.dimension_semantics<parallel>, #tpu.dimension_semantics<arbitrary>], iteration_bounds = array<i64: 1, 4>, scalar_prefetch = 0 : i64, scratch_operands = 1 : i64, tpu.core_type = #tpu.core_type<tc>, window_params = [{transform_indices = @transform_0, window_bounds = array<i64: 8, 8, 32>}, {pipeline_mode = #tpu.pipeline_mode<synchronous>, transform_indices = @transform_1, window_bounds = array<i64: 1, 1, 32>}, {transform_indices = @transform_2, window_bounds = array<i64: 32, 1024>}, {transform_indices = @transform_3, window_bounds = array<i64: 1, 1024>}, {transform_indices = @transform_4, window_bounds = array<i64: 1, 1024>}, {transform_indices = @transform_5, window_bounds = array<i64: 1, 1>}, {transform_indices = @transform_6, window_bounds = array<i64: 8, 1>}]} {
    %c0_i32 = arith.constant 0 : i32
    %0 = arith.cmpi eq, %arg1, %c0_i32 : i32
    %1 = arith.extui %0 : i1 to i32
    %c0_i32_0 = arith.constant 0 : i32
    %2 = arith.cmpi ne, %1, %c0_i32_0 : i32
    scf.if %2 {
      %c0_14 = arith.constant 0 : index
      %c0_15 = arith.constant 0 : index
      %c0_16 = arith.constant 0 : index
      %19 = vector.load %arg2[%c0_14, %c0_15, %c0_16] : memref<8x8x32xf32, #tpu.memory_space<vmem>>, vector<8x8x32xf32>
      %c0_17 = arith.constant 0 : index
      %c0_18 = arith.constant 0 : index
      %c0_19 = arith.constant 0 : index
      %20 = vector.load %arg3[%c0_17, %c0_18, %c0_19] : memref<1x1x32xf32, #tpu.memory_space<vmem>>, vector<1x1x32xf32>
      %21 = vector.broadcast %20 : vector<1x1x32xf32> to vector<8x8x32xf32>
      %22 = arith.mulf %19, %21 : vector<8x8x32xf32>
      %cst_20 = arith.constant dense<0.000000e+00> : vector<8x8xf32>
      %23 = vector.multi_reduction <add>, %22, %cst_20 [2] : vector<8x8x32xf32> to vector<8x8xf32>
      %cst_21 = arith.constant dense<0xFF800000> : vector<8xf32>
      %24 = vector.multi_reduction <maximumf>, %23, %cst_21 [1] : vector<8x8xf32> to vector<8xf32>
      %25 = vector.shape_cast %24 : vector<8xf32> to vector<8x1xf32>
      %26 = vector.broadcast %25 : vector<8x1xf32> to vector<8x8xf32>
      %27 = arith.subf %23, %26 : vector<8x8xf32>
      %28 = math.exp %27 : vector<8x8xf32>
      %cst_22 = arith.constant dense<0.000000e+00> : vector<8xf32>
      %29 = vector.multi_reduction <add>, %28, %cst_22 [1] : vector<8x8xf32> to vector<8xf32>
      %30 = vector.shape_cast %29 : vector<8xf32> to vector<8x1xf32>
      %31 = tpu.reciprocal %30 {approx = true} : vector<8x1xf32> -> vector<8x1xf32>
      %32 = arith.mulf %30, %31 : vector<8x1xf32>
      %cst_23 = arith.constant 2.000000e+00 : f32
      %33 = vector.broadcast %cst_23 : f32 to vector<8x1xf32>
      %34 = arith.subf %33, %32 : vector<8x1xf32>
      %35 = arith.mulf %31, %34 : vector<8x1xf32>
      %36 = vector.broadcast %35 : vector<8x1xf32> to vector<8x8xf32>
      %37 = arith.mulf %28, %36 : vector<8x8xf32>
      %38 = vector.shape_cast %37 : vector<8x8xf32> to vector<8x8x1xf32>
      %39 = vector.broadcast %38 : vector<8x8x1xf32> to vector<8x8x32xf32>
      %40 = arith.mulf %19, %39 : vector<8x8x32xf32>
      %cst_24 = arith.constant dense<0.000000e+00> : vector<8x32xf32>
      %41 = vector.multi_reduction <add>, %40, %cst_24 [1] : vector<8x8x32xf32> to vector<8x32xf32>
      %42 = arith.truncf %41 : vector<8x32xf32> to vector<8x32xbf16>
      %c0_25 = arith.constant 0 : index
      %c0_26 = arith.constant 0 : index
      %43 = vector.load %arg9[%c0_25, %c0_26] : memref<8x32xbf16, #tpu.memory_space<vmem>>, vector<8x32xbf16>
      tpu.vector_store %arg9[%c0_25, %c0_26], %42 {strides = array<i32>} : memref<8x32xbf16, #tpu.memory_space<vmem>>, vector<8x32xbf16>,
      %cst_27 = arith.constant 0.000000e+00 : f32
      %44 = vector.broadcast %cst_27 : f32 to vector<8x1xf32>
      %c0_28 = arith.constant 0 : index
      %c0_29 = arith.constant 0 : index
      %45 = memref.load %arg7[%c0_28, %c0_29] : memref<1x1xf32, #tpu.memory_space<smem>>
      %46 = vector.broadcast %45 : f32 to vector<8x1xf32>
      %47 = arith.addf %44, %46 : vector<8x1xf32>
      %c0_30 = arith.constant 0 : index
      %c0_31 = arith.constant 0 : index
      %48 = vector.load %arg8[%c0_30, %c0_31] : memref<8x1xf32, #tpu.memory_space<vmem>>, vector<8x1xf32>
      tpu.vector_store %arg8[%c0_30, %c0_31], %47 {strides = array<i32>} : memref<8x1xf32, #tpu.memory_space<vmem>>, vector<8x1xf32>,
    } else {
    }
    %c0 = arith.constant 0 : index
    %c0_1 = arith.constant 0 : index
    %3 = vector.load %arg9[%c0, %c0_1] : memref<8x32xbf16, #tpu.memory_space<vmem>>, vector<8x32xbf16>
    %c0_2 = arith.constant 0 : index
    %c0_3 = arith.constant 0 : index
    %4 = vector.load %arg4[%c0_2, %c0_3] : memref<32x1024xbf16, #tpu.memory_space<vmem>>, vector<32x1024xbf16>
    %cst = arith.constant dense<0.000000e+00> : vector<8x1024xf32>
    %5 = tpu.matmul %3, %4, %cst {dimension_numbers = #tpu.dot_dimension_numbers<[1], [0], [0], [1], [0, 0, 1, 1], [], []>} : vector<8x32xbf16>, vector<32x1024xbf16>, vector<8x1024xf32> -> vector<8x1024xf32>
    %c0_4 = arith.constant 0 : index
    %c0_5 = arith.constant 0 : index
    %6 = vector.load %arg5[%c0_4, %c0_5] : memref<1x1024xf32, #tpu.memory_space<vmem>>, vector<1x1024xf32>
    %7 = vector.broadcast %6 : vector<1x1024xf32> to vector<8x1024xf32>
    %8 = arith.addf %5, %7 : vector<8x1024xf32>
    %cst_6 = arith.constant 0.000000e+00 : f32
    %9 = vector.broadcast %cst_6 : f32 to vector<8x1024xf32>
    %10 = arith.maximumf %8, %9 : vector<8x1024xf32>
    %c0_7 = arith.constant 0 : index
    %c0_8 = arith.constant 0 : index
    %11 = vector.load %arg8[%c0_7, %c0_8] : memref<8x1xf32, #tpu.memory_space<vmem>>, vector<8x1xf32>
    %c0_9 = arith.constant 0 : index
    %c0_10 = arith.constant 0 : index
    %12 = vector.load %arg6[%c0_9, %c0_10] : memref<1x1024xf32, #tpu.memory_space<vmem>>, vector<1x1024xf32>
    %13 = vector.broadcast %12 : vector<1x1024xf32> to vector<8x1024xf32>
    %14 = arith.mulf %10, %13 : vector<8x1024xf32>
    %cst_11 = arith.constant dense<0.000000e+00> : vector<8xf32>
    %15 = vector.multi_reduction <add>, %14, %cst_11 [1] : vector<8x1024xf32> to vector<8xf32>
    %16 = vector.shape_cast %15 : vector<8xf32> to vector<8x1xf32>
    %17 = arith.addf %11, %16 : vector<8x1xf32>
    %c0_12 = arith.constant 0 : index
    %c0_13 = arith.constant 0 : index
    %18 = vector.load %arg8[%c0_12, %c0_13] : memref<8x1xf32, #tpu.memory_space<vmem>>, vector<8x1xf32>
    tpu.vector_store %arg8[%c0_12, %c0_13], %17 {strides = array<i32>} : memref<8x1xf32, #tpu.memory_space<vmem>>, vector<8x1xf32>,
    return
  }
  func.func @transform_0(%arg0: i32, %arg1: i32) -> (i32, i32, i32) {
    %c0_i32 = arith.constant 0 : i32
    %c0_i32_0 = arith.constant 0 : i32
    %c0_i32_1 = arith.constant 0 : i32
    return %arg0, %c0_i32, %c0_i32_0 : i32, i32, i32
  }
  func.func @transform_1(%arg0: i32, %arg1: i32) -> (i32, i32, i32) {
    %c0_i32 = arith.constant 0 : i32
    %c0_i32_0 = arith.constant 0 : i32
    %c0_i32_1 = arith.constant 0 : i32
    %c0_i32_2 = arith.constant 0 : i32
    return %c0_i32, %c0_i32_0, %c0_i32_1 : i32, i32, i32
  }
  func.func @transform_2(%arg0: i32, %arg1: i32) -> (i32, i32) {
    %c0_i32 = arith.constant 0 : i32
    %c0_i32_0 = arith.constant 0 : i32
    return %c0_i32, %arg1 : i32, i32
  }
  func.func @transform_3(%arg0: i32, %arg1: i32) -> (i32, i32) {
    %c0_i32 = arith.constant 0 : i32
    %c0_i32_0 = arith.constant 0 : i32
    return %c0_i32, %arg1 : i32, i32
  }
  func.func @transform_4(%arg0: i32, %arg1: i32) -> (i32, i32) {
    %c0_i32 = arith.constant 0 : i32
    %c0_i32_0 = arith.constant 0 : i32
    return %c0_i32, %arg1 : i32, i32
  }
  func.func @transform_5(%arg0: i32, %arg1: i32) -> (i32, i32) {
    %c0_i32 = arith.constant 0 : i32
    %c0_i32_0 = arith.constant 0 : i32
    %c0_i32_1 = arith.constant 0 : i32
    return %c0_i32, %c0_i32_0 : i32, i32
  }
  func.func @transform_6(%arg0: i32, %arg1: i32) -> (i32, i32) {
    %c0_i32 = arith.constant 0 : i32
    %c0_i32_0 = arith.constant 0 : i32
    return %arg0, %c0_i32 : i32, i32
  }
}

</mosaic_0001>

<llo_original>
// kernel: tpu_custom_call.1
$region0: #{tpu_custom_call.1}
  #allocation0 [shape = 'u32[]', space=smem, size = 0x4, offset = 0x4, fixed_abs, tag = 'smem constant byte address 0x4 - core index']
  #allocation1 [shape = 'u32[144,128]{1,0:T(1,128)}', space=vmem, size = 0x12000, scoped, tag = 'internal scratch']
  #allocation2 [shape = 'bf16[8,32]{1,0:T(8,128)(2,1)}', space=vmem, size = 0x800, scoped, tag = 'scratch operand']
  #allocation3 [shape = 'f32[1,1]{1,0:T(1,128)S(6)}', space=smem, size = 0x200, scoped, tag = 'scoped memory for tpu_custom_call.1']
  %s0 = inlined_call_operand.hbm [shape: f32[8,8,32], index: 0, kind: input, shape index: {}]
  %s1 = inlined_call_operand.vmem [shape: f32[1,1,32], index: 1, kind: input, shape index: {}]
  %s2 = inlined_call_operand.hbm [shape: bf16[32,4096], index: 2, kind: input, shape index: {}]
  %s3 = inlined_call_operand.hbm [shape: f32[1,4096], index: 3, kind: input, shape index: {}]
  %s4 = inlined_call_operand.hbm [shape: f32[1,4096], index: 4, kind: input, shape index: {}]
  %s5 = inlined_call_operand.<no memory space> [shape: f32[1,1], index: 5, kind: input, shape index: {}]
  %s6 = inlined_call_operand.vmem [shape: f32[8,1], index: 6, kind: output, shape index: {}]
  %s7 = sld [smem:[#allocation0]]
  $region77: #{tpu_custom_call.1} parent=0
    _
  %s9 = ssub.s32 1, %s7
  %s10 = scalar_select 0, %s9, %s7
  %11 = sst [smem:[#allocation3]] %s5
  $region1: #{tpu_custom_call.1} parent=0
    #allocation4 [shape = 'u8[32768]{0}', space=vmem, size = 0x8000, scoped, tag = 'input window, operand 0, single buffered']
    #allocation5 [shape = 's32[2]{0}', space=sflag, size = 0x8, scoped, tag = 'scoped memory for tpu_custom_call.1']
    #allocation6 [shape = 'u8[131072]{0}', space=vmem, size = 0x20000, scoped, tag = 'input window, operand 2']
    #allocation7 [shape = 's32[2]{0}', space=sflag, size = 0x8, scoped, tag = 'scoped memory for tpu_custom_call.1']
    #allocation8 [shape = 'u8[8192]{0}', space=vmem, size = 0x2000, scoped, tag = 'input window, operand 3']
    #allocation9 [shape = 'u8[8192]{0}', space=vmem, size = 0x2000, scoped, tag = 'input window, operand 4']
    #allocation10 [shape = 's32[2]{0}', space=sflag, size = 0x8, scoped, tag = 'scoped memory for tpu_custom_call.1']
    %12 = vsyncpa [#allocation5], 0
    %13 = vsyncpa [#allocation7], 0
    %s14 = scalar_lea.sflag [#allocation7], 1
    %15 = vsyncpa %s14, 0
    %16 = vsyncpa [#allocation10], 0
    %s17 = scalar_lea.sflag [#allocation10], 1
    %18 = vsyncpa %s17, 0
    loop: start=0, step=1, limit=6
    $region2: #{tpu_custom_call.1} parent=1 // loop_pre_header
      _
    $region3: #{tpu_custom_call.1} parent=1 // loop_header
      %s20 = sphi 0, %s24
      %p21 = scmp.ge.s32.totalorder %s20, 6
      %s27 = sphi 0, %s39
      %s28 = sphi 0, %s35
      %s29 = sphi 0, %s27
      %s30 = sphi 0, %s28
      %s31 = sphi 0, %s29
      %s32 = sphi 0, %s30
      %s42 = sphi 0, %s44
      %s45 = sphi 0, %s42
      %s46 = sphi 0, %s45
      %s62 = sphi 0, %s46
      %s66 = sphi 0, %s66
      %s68 = sphi 0, %s66
      %s69 = sphi 0, %s68
      %s83 = sphi 0, %s69
      %s89 = sphi 0, %s91
      %s92 = sphi 0, %s89
      %s93 = sphi 0, %s92
      %s109 = sphi 0, %s93
      %s115 = sphi 0, %s117
      %s118 = sphi 0, %s115
      %s119 = sphi 0, %s118
      %s135 = sphi 0, %s119
      %s141 = sphi 0, %s143
      %s144 = sphi 0, %s141
      %s145 = sphi 0, %s144
      %s161 = sphi 0, %s145
      %s165 = sphi 0, %s165
      %s167 = sphi 0, %s165
      %s168 = sphi 0, %s167
      %s182 = sphi 0, %s168
      %s188 = sphi 0, %s190
      %s191 = sphi 0, %s188
      %s192 = sphi 0, %s191
      %s208 = sphi 0, %s192
    $region4: #{tpu_custom_call.1} parent=1 // loop_header_branch
      %23 = sbr.rel (%p21) target = $region8
    $region5: #{tpu_custom_call.1} parent=1 // loop_body
      %s25 = ssub.s32 %s20, 1
      %s26 = ssub.s32 %s20, 2
      %s33 = sadd.s32 1, %s28
      %p34 = scmp.ge.s32.totalorder %s33, 4
      %s35 = scalar_select %p34, 0, %s33
      %s36 = sadd.s32 1, %s27
      %s37 = scalar_select %p34, %s36, %s27
      %p38 = scmp.ge.s32.totalorder %s37, 1
      %s39 = scalar_select %p38, 0, %s37
      %s40 = ssub.s32 %s27, %s39
      %p41 = scmp.eq.s32.totalorder %s40, 0
      %s43 = sadd.s32 %s42, 1
      %s44 = scalar_select %p41, %s42, %s43
      %p47 = pneg %p41
      %p48 = scmp.eq.s32.totalorder %s20, 3
      %p49 = por %p47, %p48
      %p50 = scmp.ne.s32.totalorder %s42, %s45
      %p51 = scmp.eq.s32.totalorder %s20, 0
      %p52 = por %p50, %p51
      %p53 = scmp.ne.s32.totalorder %s42, %s45
      %p54 = scmp.eq.s32.totalorder %s25, 3
      %p55 = por %p53, %p54
      %p56 = scmp.ne.s32.totalorder %s45, %s46
      %p57 = scmp.eq.s32.totalorder %s25, 0
      %p58 = por %p56, %p57
      %p59 = scmp.ne.s32.totalorder %s45, %s46
      %p60 = scmp.eq.s32.totalorder %s26, 3
      %p61 = por %p59, %p60
      %p63 = scmp.ne.s32.totalorder %s46, %s62
      %p64 = scmp.eq.s32.totalorder %s26, 0
      %p65 = por %p63, %p64
      %s67 = sadd.s32 %s66, 1
      %p70 = scmp.eq.s32.totalorder %s20, 3
      %p71 = scmp.ne.s32.totalorder %s66, %s68
      %p72 = scmp.eq.s32.totalorder %s20, 0
      %p73 = por %p71, %p72
      %p74 = scmp.ne.s32.totalorder %s66, %s68
      %p75 = scmp.eq.s32.totalorder %s25, 3
      %p76 = por %p74, %p75
      %p77 = scmp.ne.s32.totalorder %s68, %s69
      %p78 = scmp.eq.s32.totalorder %s25, 0
      %p79 = por %p77, %p78
      %p80 = scmp.ne.s32.totalorder %s68, %s69
      %p81 = scmp.eq.s32.totalorder %s26, 3
      %p82 = por %p80, %p81
      %p84 = scmp.ne.s32.totalorder %s69, %s83
      %p85 = scmp.eq.s32.totalorder %s26, 0
      %p86 = por %p84, %p85
      %s87 = ssub.s32 %s28, %s35
      %p88 = scmp.eq.s32.totalorder %s87, 0
      %s90 = sadd.s32 %s89, 1
      %s91 = scalar_select %p88, %s89, %s90
      %p94 = pneg %p88
      %p95 = scmp.eq.s32.totalorder %s20, 3
      %p96 = por %p94, %p95
      %p97 = scmp.ne.s32.totalorder %s89, %s92
      %p98 = scmp.eq.s32.totalorder %s20, 0
      %p99 = por %p97, %p98
      %p100 = scmp.ne.s32.totalorder %s89, %s92
      %p101 = scmp.eq.s32.totalorder %s25, 3
      %p102 = por %p100, %p101
      %p103 = scmp.ne.s32.totalorder %s92, %s93
      %p104 = scmp.eq.s32.totalorder %s25, 0
      %p105 = por %p103, %p104
      %p106 = scmp.ne.s32.totalorder %s92, %s93
      %p107 = scmp.eq.s32.totalorder %s26, 3
      %p108 = por %p106, %p107
      %p110 = scmp.ne.s32.totalorder %s93, %s109
      %p111 = scmp.eq.s32.totalorder %s26, 0
      %p112 = por %p110, %p111
      %s113 = ssub.s32 %s28, %s35
      %p114 = scmp.eq.s32.totalorder %s113, 0
      %s116 = sadd.s32 %s115, 1
      %s117 = scalar_select %p114, %s115, %s116
      %p120 = pneg %p114
      %p121 = scmp.eq.s32.totalorder %s20, 3
      %p122 = por %p120, %p121
      %p123 = scmp.ne.s32.totalorder %s115, %s118
      %p124 = scmp.eq.s32.totalorder %s20, 0
      %p125 = por %p123, %p124
      %p126 = scmp.ne.s32.totalorder %s115, %s118
      %p127 = scmp.eq.s32.totalorder %s25, 3
      %p128 = por %p126, %p127
      %p129 = scmp.ne.s32.totalorder %s118, %s119
      %p130 = scmp.eq.s32.totalorder %s25, 0
      %p131 = por %p129, %p130
      %p132 = scmp.ne.s32.totalorder %s118, %s119
      %p133 = scmp.eq.s32.totalorder %s26, 3
      %p134 = por %p132, %p133
      %p136 = scmp.ne.s32.totalorder %s119, %s135
      %p137 = scmp.eq.s32.totalorder %s26, 0
      %p138 = por %p136, %p137
      %s139 = ssub.s32 %s28, %s35
      %p140 = scmp.eq.s32.totalorder %s139, 0
      %s142 = sadd.s32 %s141, 1
      %s143 = scalar_select %p140, %s141, %s142
      %p146 = pneg %p140
      %p147 = scmp.eq.s32.totalorder %s20, 3
      %p148 = por %p146, %p147
      %p149 = scmp.ne.s32.totalorder %s141, %s144
      %p150 = scmp.eq.s32.totalorder %s20, 0
      %p151 = por %p149, %p150
      %p152 = scmp.ne.s32.totalorder %s141, %s144
      %p153 = scmp.eq.s32.totalorder %s25, 3
      %p154 = por %p152, %p153
      %p155 = scmp.ne.s32.totalorder %s144, %s145
      %p156 = scmp.eq.s32.totalorder %s25, 0
      %p157 = por %p155, %p156
      %p158 = scmp.ne.s32.totalorder %s144, %s145
      %p159 = scmp.eq.s32.totalorder %s26, 3
      %p160 = por %p158, %p159
      %p162 = scmp.ne.s32.totalorder %s145, %s161
      %p163 = scmp.eq.s32.totalorder %s26, 0
      %p164 = por %p162, %p163
      %s166 = sadd.s32 %s165, 1
      %p169 = scmp.eq.s32.totalorder %s20, 3
      %p170 = scmp.ne.s32.totalorder %s165, %s167
      %p171 = scmp.eq.s32.totalorder %s20, 0
      %p172 = por %p170, %p171
      %p173 = scmp.ne.s32.totalorder %s165, %s167
      %p174 = scmp.eq.s32.totalorder %s25, 3
      %p175 = por %p173, %p174
      %p176 = scmp.ne.s32.totalorder %s167, %s168
      %p177 = scmp.eq.s32.totalorder %s25, 0
      %p178 = por %p176, %p177
      %p179 = scmp.ne.s32.totalorder %s167, %s168
      %p180 = scmp.eq.s32.totalorder %s26, 3
      %p181 = por %p179, %p180
      %p183 = scmp.ne.s32.totalorder %s168, %s182
      %p184 = scmp.eq.s32.totalorder %s26, 0
      %p185 = por %p183, %p184
      %s186 = ssub.s32 %s27, %s39
      %p187 = scmp.eq.s32.totalorder %s186, 0
      %s189 = sadd.s32 %s188, 1
      %s190 = scalar_select %p187, %s188, %s189
      %p193 = pneg %p187
      %p194 = scmp.eq.s32.totalorder %s20, 3
      %p195 = por %p193, %p194
      %p196 = scmp.ne.s32.totalorder %s188, %s191
      %p197 = scmp.eq.s32.totalorder %s20, 0
      %p198 = por %p196, %p197
      %p199 = scmp.ne.s32.totalorder %s188, %s191
      %p200 = scmp.eq.s32.totalorder %s25, 3
      %p201 = por %p199, %p200
      %p202 = scmp.ne.s32.totalorder %s191, %s192
      %p203 = scmp.eq.s32.totalorder %s25, 0
      %p204 = por %p202, %p203
      %p205 = scmp.ne.s32.totalorder %s191, %s192
      %p206 = scmp.eq.s32.totalorder %s26, 3
      %p207 = por %p205, %p206
      %p209 = scmp.ne.s32.totalorder %s192, %s208
      %p210 = scmp.eq.s32.totalorder %s26, 0
      %p211 = por %p209, %p210
      %p212 = scmp.le.s32.totalorder 1, %s20
      %p213 = scmp.lt.s32.totalorder %s20, 5
      %p214 = pnand %p212, %p213
      %p215 = pneg %p214
      // Predicated region
      $region9: #{tpu_custom_call.1} parent=5 // pred_check
        _
      $region10: #{tpu_custom_call.1} parent=5 // pred_check_branch
        %217 = sbr.rel (%p214) target = $region12
      $region11: #{tpu_custom_call.1} parent=5 // pred_region
        %s218 = ssub.s32 %s20, 1
        // Predicated region
        $region13: #{tpu_custom_call.1} parent=11 // pred_check
          %p219 = pneg %p58
        $region14: #{tpu_custom_call.1} parent=11 // pred_check_branch
          %221 = sbr.rel (%p219) target = $region16
        $region15: #{tpu_custom_call.1} parent=11 // pred_region
          %s222 = smul.u32 8, %s29
          %s224 = ssub.s32 1024, 1024
          %225 = vsyncadd [#allocation5], %s224
          %s226 = smul.addr %s222, 128
          %s227 = scalar_lea.hbm %s0, %s226
          %s228 = sshll.u32 [#allocation4], 4
          %s229 = int_to_ptr.vmem [resolvable:$true] %s228
          %234 = dma.hbm_to_vmem [thread:$0]  %s227, 1024, %s229, [#allocation5], 128, 128, 8
        $region16: #{tpu_custom_call.1} parent=11 // pred_fallthru
          _
        // Predicated region
        $region17: #{tpu_custom_call.1} parent=11 // pred_check
          %p235 = pneg %p79
        $region18: #{tpu_custom_call.1} parent=11 // pred_check_branch
          %237 = sbr.rel (%p235) target = $region20
        $region19: #{tpu_custom_call.1} parent=11 // pred_region
          _
        $region20: #{tpu_custom_call.1} parent=11 // pred_fallthru
          _
        // Predicated region
        $region21: #{tpu_custom_call.1} parent=11 // pred_check
          %p238 = pneg %p178
        $region22: #{tpu_custom_call.1} parent=11 // pred_check_branch
          %240 = sbr.rel (%p238) target = $region24
        $region23: #{tpu_custom_call.1} parent=11 // pred_region
          _
        $region24: #{tpu_custom_call.1} parent=11 // pred_fallthru
          _
      $region12: #{tpu_custom_call.1} parent=5 // pred_fallthru
        _
      %p241 = scmp.lt.s32.totalorder %s20, 4
      // Predicated region
      $region25: #{tpu_custom_call.1} parent=5 // pred_check
        %p242 = pneg %p241
      $region26: #{tpu_custom_call.1} parent=5 // pred_check_branch
        %244 = sbr.rel (%p242) target = $region28
      $region27: #{tpu_custom_call.1} parent=5 // pred_region
        // Predicated region
        $region29: #{tpu_custom_call.1} parent=27 // pred_check
          %p245 = pneg %p99
        $region30: #{tpu_custom_call.1} parent=27 // pred_check_branch
          %247 = sbr.rel (%p245) target = $region32
        $region31: #{tpu_custom_call.1} parent=27 // pred_region
          %s248 = sand.u32 %s20, 1
          %s249 = scalar_lea.sflag [#allocation7], %s248
          %s250 = sand.u32 %s89, 1
          %s251 = smul.addr %s250, 128
          %s252 = scalar_lea.vmem [#allocation6], %s251
          %s253 = smul.u32 8, %s28
          %s255 = ssub.s32 2048, 2048
          %256 = vsyncadd %s249, %s255
          %s257 = smul.addr %s253, 64
          %s258 = scalar_lea.hbm %s2, %s257
          %s259 = sshll.u32 %s252, 4
          %s260 = int_to_ptr.vmem [resolvable:$true] %s259
          %265 = dma.hbm_to_vmem [thread:$0]  %s258, 2048, %s260, %s249, 2048, 512, 32
        $region32: #{tpu_custom_call.1} parent=27 // pred_fallthru
          _
        // Predicated region
        $region33: #{tpu_custom_call.1} parent=27 // pred_check
          %p266 = pneg %p125
        $region34: #{tpu_custom_call.1} parent=27 // pred_check_branch
          %268 = sbr.rel (%p266) target = $region36
        $region35: #{tpu_custom_call.1} parent=27 // pred_region
          %s269 = sand.u32 %s20, 1
          %s270 = scalar_lea.sflag [#allocation7], %s269
          %s271 = sand.u32 %s115, 1
          %s272 = smul.addr %s271, 8
          %s273 = scalar_lea.vmem [#allocation8], %s272
          %s274 = smul.u32 8, %s28
          %s276 = ssub.s32 128, 128
          %277 = vsyncadd %s270, %s276
          %s278 = smul.addr %s274, 16
          %s279 = scalar_lea.hbm %s3, %s278
          %s281 = sshll.u32 %s273, 4
          %s282 = int_to_ptr.vmem [resolvable:$true] %s281
          %284 = dma.hbm_to_vmem [thread:$0]  %s279, 128, %s282, %s270
        $region36: #{tpu_custom_call.1} parent=27 // pred_fallthru
          _
        // Predicated region
        $region37: #{tpu_custom_call.1} parent=27 // pred_check
          %p285 = pneg %p151
        $region38: #{tpu_custom_call.1} parent=27 // pred_check_branch
          %287 = sbr.rel (%p285) target = $region40
        $region39: #{tpu_custom_call.1} parent=27 // pred_region
          %s288 = sand.u32 %s141, 1
          %s289 = scalar_lea.sflag [#allocation10], %s288
          %s290 = sand.u32 %s141, 1
          %s291 = smul.addr %s290, 8
          %s292 = scalar_lea.vmem [#allocation9], %s291
          %s293 = smul.u32 8, %s28
          %s295 = ssub.s32 128, 128
          %296 = vsyncadd %s289, %s295
          %s297 = smul.addr %s293, 16
          %s298 = scalar_lea.hbm %s4, %s297
          %s300 = sshll.u32 %s292, 4
          %s301 = int_to_ptr.vmem [resolvable:$true] %s300
          %303 = dma.hbm_to_vmem [thread:$0]  %s298, 128, %s301, %s289
        $region40: #{tpu_custom_call.1} parent=27 // pred_fallthru
          _
      $region28: #{tpu_custom_call.1} parent=5 // pred_fallthru
        _
      %p304 = scmp.le.s32.totalorder 1, %s20
      %p305 = scmp.lt.s32.totalorder %s20, 5
      %p306 = pnand %p304, %p305
      %p307 = pneg %p306
      // Predicated region
      $region41: #{tpu_custom_call.1} parent=5 // pred_check
        _
      $region42: #{tpu_custom_call.1} parent=5 // pred_check_branch
        %309 = sbr.rel (%p306) target = $region44
      $region43: #{tpu_custom_call.1} parent=5 // pred_region
        %s310 = ssub.s32 %s20, 1
        // Predicated region
        $region45: #{tpu_custom_call.1} parent=43 // pred_check
          %p311 = pneg %p58
        $region46: #{tpu_custom_call.1} parent=43 // pred_check_branch
          %313 = sbr.rel (%p311) target = $region48
        $region47: #{tpu_custom_call.1} parent=43 // pred_region
          %314 = dma.done [#allocation5], 1024
        $region48: #{tpu_custom_call.1} parent=43 // pred_fallthru
          _
        %s315 = sand.u32 %s25, 1
        %s316 = scalar_lea.sflag [#allocation7], %s315
        %s317 = sand.u32 %s92, 1
        %s318 = smul.addr %s317, 128
        %s319 = scalar_lea.vmem [#allocation6], %s318
        // Predicated region
        $region49: #{tpu_custom_call.1} parent=43 // pred_check
          %p320 = pneg %p105
        $region50: #{tpu_custom_call.1} parent=43 // pred_check_branch
          %322 = sbr.rel (%p320) target = $region52
        $region51: #{tpu_custom_call.1} parent=43 // pred_region
          %323 = dma.done %s316, 2048
        $region52: #{tpu_custom_call.1} parent=43 // pred_fallthru
          _
        %s324 = sand.u32 %s25, 1
        %s325 = scalar_lea.sflag [#allocation7], %s324
        %s326 = sand.u32 %s118, 1
        %s327 = smul.addr %s326, 8
        %s328 = scalar_lea.vmem [#allocation8], %s327
        // Predicated region
        $region53: #{tpu_custom_call.1} parent=43 // pred_check
          %p329 = pneg %p131
        $region54: #{tpu_custom_call.1} parent=43 // pred_check_branch
          %331 = sbr.rel (%p329) target = $region56
        $region55: #{tpu_custom_call.1} parent=43 // pred_region
          %332 = dma.done %s325, 128
        $region56: #{tpu_custom_call.1} parent=43 // pred_fallthru
          _
        %s333 = sand.u32 %s144, 1
        %s334 = scalar_lea.sflag [#allocation10], %s333
        %s335 = sand.u32 %s144, 1
        %s336 = smul.addr %s335, 8
        %s337 = scalar_lea.vmem [#allocation9], %s336
        // Predicated region
        $region57: #{tpu_custom_call.1} parent=43 // pred_check
          %p338 = pneg %p157
        $region58: #{tpu_custom_call.1} parent=43 // pred_check_branch
          %340 = sbr.rel (%p338) target = $region60
        $region59: #{tpu_custom_call.1} parent=43 // pred_region
          %341 = dma.done %s334, 128
        $region60: #{tpu_custom_call.1} parent=43 // pred_fallthru
          _
        %p342 = pneg %p58
        %p343 = pneg %p55
        %p344 = pneg %p79
        %p345 = pneg %p76
        %s346 = sand.u32 %s25, 1
        %s347 = scalar_lea.sflag [#allocation7], %s346
        %s348 = sand.u32 %s92, 1
        %s349 = smul.addr %s348, 128
        %s350 = scalar_lea.vmem [#allocation6], %s349
        %p351 = pneg %p105
        %p352 = pneg %p102
        %s353 = sand.u32 %s25, 1
        %s354 = scalar_lea.sflag [#allocation7], %s353
        %s355 = sand.u32 %s118, 1
        %s356 = smul.addr %s355, 8
        %s357 = scalar_lea.vmem [#allocation8], %s356
        %p358 = pneg %p131
        %p359 = pneg %p128
        %s360 = sand.u32 %s144, 1
        %s361 = scalar_lea.sflag [#allocation10], %s360
        %s362 = sand.u32 %s144, 1
        %s363 = smul.addr %s362, 8
        %s364 = scalar_lea.vmem [#allocation9], %s363
        %p365 = pneg %p157
        %p366 = pneg %p154
        %p367 = pneg %p178
        %p368 = pneg %p175
        %p369 = pneg %p204
        %p370 = pneg %p201
        %p371 = scmp.lt.s32.totalorder %s29, 0
        %s372 = scalar_select %p371, %s29, 0
        %s373 = smul.addr %s372, 8
        %s374 = scalar_lea.vmem %s6, %s373
        %s375 = smul.u32 8, %s29
        %s376 = smul.u32 8, %s30
        %s377 = smul.u32 8, %s30
        %s378 = smul.u32 8, %s30
        %p379 = scmp.lt.s32.totalorder %s29, 0
        %s380 = scalar_select %p379, %s29, 0
        %s381 = smul.addr %s380, 8
        %s382 = scalar_lea.vmem %s6, %s381
        %p384 = scmp.eq.s32.totalorder %s30, 0
        // Predicated region
        $region61: #{tpu_custom_call.1} parent=43 // pred_check
          %p385 = pneg %p384
        $region62: #{tpu_custom_call.1} parent=43 // pred_check_branch
          %387 = sbr.rel (%p385) target = $region64
        $region63: #{tpu_custom_call.1} parent=43 // pred_region
          %v388 = vld [vmem:[#allocation4] sm:$0xff]
          %v389 = vld [vmem:[#allocation4 + $0x8] sm:$0xff]
          %v390 = vld [vmem:[#allocation4 + $0x10] sm:$0xff]
          %v391 = vld [vmem:[#allocation4 + $0x18] sm:$0xff]
          %v392 = vld [vmem:[#allocation4 + $0x20] sm:$0xff]
          %v393 = vld [vmem:[#allocation4 + $0x28] sm:$0xff]
          %v394 = vld [vmem:[#allocation4 + $0x30] sm:$0xff]
          %v395 = vld [vmem:[#allocation4 + $0x38] sm:$0xff]
          %v396 = vld [vmem:[%s1] sm:$0x1]
          %v398 = vlaneseq
          %v399 = vshrl.u32 %v398, 7
          %v400 = vsub.s32 0, %v399
          %v401 = vrot.slane %v396, %v400
          %v403 = vmul.f32 %v388, %v401
          %v404 = vmul.f32 %v389, %v401
          %v405 = vmul.f32 %v390, %v401
          %v406 = vmul.f32 %v391, %v401
          %v407 = vmul.f32 %v392, %v401
          %v408 = vmul.f32 %v393, %v401
          %v409 = vmul.f32 %v394, %v401
          %v410 = vmul.f32 %v395, %v401
          %vm411 = vcmask 261120
          %v412 = vsel %vm411, %v403, 0.0
          %413 = vadd.xlane.f32.xlu0 %v412
          %v414 = vpop.xlane.xlu0 %413
          %v415 = vsel %vm411, %v404, 0.0
          %416 = vadd.xlane.f32.xlu0 %v415
          %v417 = vpop.xlane.xlu0 %416
          %v418 = vsel %vm411, %v405, 0.0
          %419 = vadd.xlane.f32.xlu0 %v418
          %v420 = vpop.xlane.xlu0 %419
          %v421 = vsel %vm411, %v406, 0.0
          %422 = vadd.xlane.f32.xlu0 %v421
          %v423 = vpop.xlane.xlu0 %422
          %v424 = vsel %vm411, %v407, 0.0
          %425 = vadd.xlane.f32.xlu0 %v424
          %v426 = vpop.xlane.xlu0 %425
          %v427 = vsel %vm411, %v408, 0.0
          %428 = vadd.xlane.f32.xlu0 %v427
          %v429 = vpop.xlane.xlu0 %428
          %v430 = vsel %vm411, %v409, 0.0
          %431 = vadd.xlane.f32.xlu0 %v430
          %v432 = vpop.xlane.xlu0 %431
          %v433 = vsel %vm411, %v410, 0.0
          %434 = vadd.xlane.f32.xlu0 %v433
          %v435 = vpop.xlane.xlu0 %434
          %v444 = vlaneseq
          %v445 = vand.u32 %v444, 127
          %v446 = vlaneseq
          %v447 = vshrl.u32 %v446, 7
          %v448 = vsub.s32 %v445, %v447
          %v449 = vrot.slane %v414, %v448
          %v450 = vlaneseq
          %v451 = vshrl.u32 %v450, 7
          %v452 = vsub.s32 %v445, %v451
          %v453 = vrot.slane %v417, %v452
          %v454 = vlaneseq
          %v455 = vshrl.u32 %v454, 7
          %v456 = vsub.s32 %v445, %v455
          %v457 = vrot.slane %v420, %v456
          %v458 = vlaneseq
          %v459 = vshrl.u32 %v458, 7
          %v460 = vsub.s32 %v445, %v459
          %v461 = vrot.slane %v423, %v460
          %v462 = vlaneseq
          %v463 = vshrl.u32 %v462, 7
          %v464 = vsub.s32 %v445, %v463
          %v465 = vrot.slane %v426, %v464
          %v466 = vlaneseq
          %v467 = vshrl.u32 %v466, 7
          %v468 = vsub.s32 %v445, %v467
          %v469 = vrot.slane %v429, %v468
          %v470 = vlaneseq
          %v471 = vshrl.u32 %v470, 7
          %v472 = vsub.s32 %v445, %v471
          %v473 = vrot.slane %v432, %v472
          %v474 = vlaneseq
          %v475 = vshrl.u32 %v474, 7
          %v476 = vsub.s32 %v445, %v475
          %v477 = vrot.slane %v435, %v476
          %vm478 = vcmask 1041409
          %v479 = vsel %vm478, %v453, %v449
          %vm480 = vcmask 1042434
          %v481 = vsel %vm480, %v457, %v479
          %vm482 = vcmask 1043459
          %v483 = vsel %vm482, %v461, %v481
          %vm484 = vcmask 1044484
          %v485 = vsel %vm484, %v465, %v483
          %vm486 = vcmask 1045509
          %v487 = vsel %vm486, %v469, %v485
          %vm488 = vcmask 1046534
          %v489 = vsel %vm488, %v473, %v487
          %vm490 = vcmask 1047559
          %v491 = vsel %vm490, %v477, %v489
          %vm493 = vcmask 64512
          %v494 = vsel %vm493, %v491, -inf
          %495 = vmax.xlane.f32.xlu0 %v494
          %v496 = vpop.xlane.xlu0 %495
          %v498 = vlaneseq
          %v499 = vshrl.u32 %v498, 7
          %v500 = vsub.s32 0, %v499
          %v501 = vrot.slane %v496, %v500
          %v502 = vlaneseq
          %v503 = vshrl.u32 %v502, 7
          %v504 = vsub.s32 1, %v503
          %v505 = vrot.slane %v496, %v504
          %v506 = vlaneseq
          %v507 = vshrl.u32 %v506, 7
          %v508 = vsub.s32 2, %v507
          %v509 = vrot.slane %v496, %v508
          %v510 = vlaneseq
          %v511 = vshrl.u32 %v510, 7
          %v512 = vsub.s32 3, %v511
          %v513 = vrot.slane %v496, %v512
          %v514 = vlaneseq
          %v515 = vshrl.u32 %v514, 7
          %v516 = vsub.s32 4, %v515
          %v517 = vrot.slane %v496, %v516
          %v518 = vlaneseq
          %v519 = vshrl.u32 %v518, 7
          %v520 = vsub.s32 5, %v519
          %v521 = vrot.slane %v496, %v520
          %v522 = vlaneseq
          %v523 = vshrl.u32 %v522, 7
          %v524 = vsub.s32 6, %v523
          %v525 = vrot.slane %v496, %v524
          %v526 = vlaneseq
          %v527 = vshrl.u32 %v526, 7
          %v528 = vsub.s32 7, %v527
          %v529 = vrot.slane %v496, %v528
          %v538 = vsub.f32 %v414, %v501
          %v539 = vsub.f32 %v417, %v505
          %v540 = vsub.f32 %v420, %v509
          %v541 = vsub.f32 %v423, %v513
          %v542 = vsub.f32 %v426, %v517
          %v543 = vsub.f32 %v429, %v521
          %v544 = vsub.f32 %v432, %v525
          %v545 = vsub.f32 %v435, %v529
          %v546 = vmul.f32 %v538, 1.442695
          %v547 = vpow.pop %v546
          %v548 = vmul.f32 %v539, 1.442695
          %v549 = vpow.pop %v548
          %v550 = vmul.f32 %v540, 1.442695
          %v551 = vpow.pop %v550
          %v552 = vmul.f32 %v541, 1.442695
          %v553 = vpow.pop %v552
          %v554 = vmul.f32 %v542, 1.442695
          %v555 = vpow.pop %v554
          %v556 = vmul.f32 %v543, 1.442695
          %v557 = vpow.pop %v556
          %v558 = vmul.f32 %v544, 1.442695
          %v559 = vpow.pop %v558
          %v560 = vmul.f32 %v545, 1.442695
          %v561 = vpow.pop %v560
          %570 = vset.pattern.permute.xlu0 0
          %571 = vperm.xlu0 %570, %v547
          %v572 = vpop.permute.xlu0 %571
          %573 = vset.pattern.permute.xlu0 0
          %574 = vperm.xlu0 %573, %v549
          %v575 = vpop.permute.xlu0 %574
          %576 = vset.pattern.permute.xlu0 0
          %577 = vperm.xlu0 %576, %v551
          %v578 = vpop.permute.xlu0 %577
          %579 = vset.pattern.permute.xlu0 0
          %580 = vperm.xlu0 %579, %v553
          %v581 = vpop.permute.xlu0 %580
          %582 = vset.pattern.permute.xlu0 0
          %583 = vperm.xlu0 %582, %v555
          %v584 = vpop.permute.xlu0 %583
          %585 = vset.pattern.permute.xlu0 0
          %586 = vperm.xlu0 %585, %v557
          %v587 = vpop.permute.xlu0 %586
          %588 = vset.pattern.permute.xlu0 0
          %589 = vperm.xlu0 %588, %v559
          %v590 = vpop.permute.xlu0 %589
          %591 = vset.pattern.permute.xlu0 0
          %592 = vperm.xlu0 %591, %v561
          %v593 = vpop.permute.xlu0 %592
          %v594 = vlaneseq
          %v595 = vshrl.u32 %v594, 7
          %v596 = vsub.s32 %v445, %v595
          %v597 = vrot.slane %v572, %v596
          %v598 = vlaneseq
          %v599 = vshrl.u32 %v598, 7
          %v600 = vsub.s32 %v445, %v599
          %v601 = vrot.slane %v575, %v600
          %v602 = vlaneseq
          %v603 = vshrl.u32 %v602, 7
          %v604 = vsub.s32 %v445, %v603
          %v605 = vrot.slane %v578, %v604
          %v606 = vlaneseq
          %v607 = vshrl.u32 %v606, 7
          %v608 = vsub.s32 %v445, %v607
          %v609 = vrot.slane %v581, %v608
          %v610 = vlaneseq
          %v611 = vshrl.u32 %v610, 7
          %v612 = vsub.s32 %v445, %v611
          %v613 = vrot.slane %v584, %v612
          %v614 = vlaneseq
          %v615 = vshrl.u32 %v614, 7
          %v616 = vsub.s32 %v445, %v615
          %v617 = vrot.slane %v587, %v616
          %v618 = vlaneseq
          %v619 = vshrl.u32 %v618, 7
          %v620 = vsub.s32 %v445, %v619
          %v621 = vrot.slane %v590, %v620
          %v622 = vlaneseq
          %v623 = vshrl.u32 %v622, 7
          %v624 = vsub.s32 %v445, %v623
          %v625 = vrot.slane %v593, %v624
          %v626 = vsel %vm478, %v601, %v597
          %v627 = vsel %vm480, %v605, %v626
          %v628 = vsel %vm482, %v609, %v627
          %v629 = vsel %vm484, %v613, %v628
          %v630 = vsel %vm486, %v617, %v629
          %v631 = vsel %vm488, %v621, %v630
          %v632 = vsel %vm490, %v625, %v631
          %v634 = vsel %vm493, %v632, 0.0
          %635 = vadd.xlane.f32.xlu0 %v634
          %v636 = vpop.xlane.xlu0 %635
          %v637 = vrcp.pop %v636
          %v638 = vmul.f32 %v636, %v637
          %v639 = vsub.f32 2.0, %v638
          %v640 = vmul.f32 %v637, %v639
          %v642 = vlaneseq
          %v643 = vshrl.u32 %v642, 7
          %v644 = vsub.s32 0, %v643
          %v645 = vrot.slane %v640, %v644
          %v646 = vlaneseq
          %v647 = vshrl.u32 %v646, 7
          %v648 = vsub.s32 1, %v647
          %v649 = vrot.slane %v640, %v648
          %v650 = vlaneseq
          %v651 = vshrl.u32 %v650, 7
          %v652 = vsub.s32 2, %v651
          %v653 = vrot.slane %v640, %v652
          %v654 = vlaneseq
          %v655 = vshrl.u32 %v654, 7
          %v656 = vsub.s32 3, %v655
          %v657 = vrot.slane %v640, %v656
          %v658 = vlaneseq
          %v659 = vshrl.u32 %v658, 7
          %v660 = vsub.s32 4, %v659
          %v661 = vrot.slane %v640, %v660
          %v662 = vlaneseq
          %v663 = vshrl.u32 %v662, 7
          %v664 = vsub.s32 5, %v663
          %v665 = vrot.slane %v640, %v664
          %v666 = vlaneseq
          %v667 = vshrl.u32 %v666, 7
          %v668 = vsub.s32 6, %v667
          %v669 = vrot.slane %v640, %v668
          %v670 = vlaneseq
          %v671 = vshrl.u32 %v670, 7
          %v672 = vsub.s32 7, %v671
          %v673 = vrot.slane %v640, %v672
          %v682 = vmul.f32 %v547, %v645
          %v683 = vmul.f32 %v549, %v649
          %v684 = vmul.f32 %v551, %v653
          %v685 = vmul.f32 %v553, %v657
          %v686 = vmul.f32 %v555, %v661
          %v687 = vmul.f32 %v557, %v665
          %v688 = vmul.f32 %v559, %v669
          %v689 = vmul.f32 %v561, %v673
          %691 = vset.pattern.permute.xlu0 0
          %692 = vperm.xlu0 %691, %v682
          %v693 = vpop.permute.xlu0 %692
          %696 = vset.pattern.permute.xlu0 0
          %697 = vperm.xlu0 %696, %v683
          %v698 = vpop.permute.xlu0 %697
          %701 = vset.pattern.permute.xlu0 0
          %702 = vperm.xlu0 %701, %v684
          %v703 = vpop.permute.xlu0 %702
          %706 = vset.pattern.permute.xlu0 0
          %707 = vperm.xlu0 %706, %v685
          %v708 = vpop.permute.xlu0 %707
          %711 = vset.pattern.permute.xlu0 0
          %712 = vperm.xlu0 %711, %v686
          %v713 = vpop.permute.xlu0 %712
          %716 = vset.pattern.permute.xlu0 0
          %717 = vperm.xlu0 %716, %v687
          %v718 = vpop.permute.xlu0 %717
          %721 = vset.pattern.permute.xlu0 0
          %722 = vperm.xlu0 %721, %v688
          %v723 = vpop.permute.xlu0 %722
          %726 = vset.pattern.permute.xlu0 0
          %727 = vperm.xlu0 %726, %v689
          %v728 = vpop.permute.xlu0 %727
          %v730 = vmul.f32 %v388, %v693
          %v731 = vmul.f32 %v389, %v698
          %v732 = vmul.f32 %v390, %v703
          %v733 = vmul.f32 %v391, %v708
          %v734 = vmul.f32 %v392, %v713
          %v735 = vmul.f32 %v393, %v718
          %v736 = vmul.f32 %v394, %v723
          %v737 = vmul.f32 %v395, %v728
          %v738 = vsel %vm411, %v730, 0.0
          %v739 = vrot.slane %v738, 4
          %v740 = vadd.f32 %v738, %v739
          %v741 = vrot.slane %v740, 2
          %v742 = vadd.f32 %v740, %v741
          %v743 = vrot.slane %v742, 1
          %v744 = vadd.f32 %v742, %v743
          %v745 = vsel %vm411, %v731, 0.0
          %v746 = vrot.slane %v745, 4
          %v747 = vadd.f32 %v745, %v746
          %v748 = vrot.slane %v747, 2
          %v749 = vadd.f32 %v747, %v748
          %v750 = vrot.slane %v749, 1
          %v751 = vadd.f32 %v749, %v750
          %v752 = vsel %vm411, %v732, 0.0
          %v753 = vrot.slane %v752, 4
          %v754 = vadd.f32 %v752, %v753
          %v755 = vrot.slane %v754, 2
          %v756 = vadd.f32 %v754, %v755
          %v757 = vrot.slane %v756, 1
          %v758 = vadd.f32 %v756, %v757
          %v759 = vsel %vm411, %v733, 0.0
          %v760 = vrot.slane %v759, 4
          %v761 = vadd.f32 %v759, %v760
          %v762 = vrot.slane %v761, 2
          %v763 = vadd.f32 %v761, %v762
          %v764 = vrot.slane %v763, 1
          %v765 = vadd.f32 %v763, %v764
          %v766 = vsel %vm411, %v734, 0.0
          %v767 = vrot.slane %v766, 4
          %v768 = vadd.f32 %v766, %v767
          %v769 = vrot.slane %v768, 2
          %v770 = vadd.f32 %v768, %v769
          %v771 = vrot.slane %v770, 1
          %v772 = vadd.f32 %v770, %v771
          %v773 = vsel %vm411, %v735, 0.0
          %v774 = vrot.slane %v773, 4
          %v775 = vadd.f32 %v773, %v774
          %v776 = vrot.slane %v775, 2
          %v777 = vadd.f32 %v775, %v776
          %v778 = vrot.slane %v777, 1
          %v779 = vadd.f32 %v777, %v778
          %v780 = vsel %vm411, %v736, 0.0
          %v781 = vrot.slane %v780, 4
          %v782 = vadd.f32 %v780, %v781
          %v783 = vrot.slane %v782, 2
          %v784 = vadd.f32 %v782, %v783
          %v785 = vrot.slane %v784, 1
          %v786 = vadd.f32 %v784, %v785
          %v787 = vsel %vm411, %v737, 0.0
          %v788 = vrot.slane %v787, 4
          %v789 = vadd.f32 %v787, %v788
          %v790 = vrot.slane %v789, 2
          %v791 = vadd.f32 %v789, %v790
          %v792 = vrot.slane %v791, 1
          %v793 = vadd.f32 %v791, %v792
          %v794 = vpack.c.bf16 %v744, %v744
          %v795 = vpack.c.bf16 %v751, %v751
          %v796 = vpack.c.bf16 %v758, %v758
          %v797 = vpack.c.bf16 %v765, %v765
          %v798 = vpack.c.bf16 %v772, %v772
          %v799 = vpack.c.bf16 %v779, %v779
          %v800 = vpack.c.bf16 %v786, %v786
          %v801 = vpack.c.bf16 %v793, %v793
          %v810 = vunpack.c.l.b16 %v794
          %v811 = vunpack.c.l.b16 %v795
          %v812 = vunpack.c.l.b16 %v796
          %v813 = vunpack.c.l.b16 %v797
          %v814 = vunpack.c.l.b16 %v798
          %v815 = vunpack.c.l.b16 %v799
          %v816 = vunpack.c.l.b16 %v800
          %v817 = vunpack.c.l.b16 %v801
          %v818 = vpack.c.b16 %v810, %v810
          %v819 = vpack.c.b16 %v811, %v811
          %v820 = vpack.c.b16 %v812, %v812
          %v821 = vpack.c.b16 %v813, %v813
          %v822 = vpack.c.b16 %v814, %v814
          %v823 = vpack.c.b16 %v815, %v815
          %v824 = vpack.c.b16 %v816, %v816
          %v825 = vpack.c.b16 %v817, %v817
          %v826 = vunpack.c.l.b16 %v818
          %v827 = vunpack.c.l.b16 %v819
          %v828 = vunpack.c.l.b16 %v820
          %v829 = vunpack.c.l.b16 %v821
          %v830 = vunpack.c.l.b16 %v822
          %v831 = vunpack.c.l.b16 %v823
          %v832 = vunpack.c.l.b16 %v824
          %v833 = vunpack.c.l.b16 %v825
          %v834 = vsel %vm478, %v827, %v826
          %v835 = vsel %vm480, %v828, %v834
          %v836 = vsel %vm482, %v829, %v835
          %v837 = vsel %vm484, %v830, %v836
          %v838 = vsel %vm486, %v831, %v837
          %v839 = vsel %vm488, %v832, %v838
          %v840 = vsel %vm490, %v833, %v839
          %v841 = vpack.c.b16 %v840, %v840
          %vm843 = vcmask 257024
          %844 = vst.msk [vmem:[#allocation2] sm:$0xf] %vm843, %v841
          %s845 = sld [smem:[#allocation3]]
          %v846 = vstv %s845
          %v847 = vadd.f32 %v846, 0.0
          %vm848 = vcmask 7168
          %849 = vst.msk [vmem:[%s382] sm:$0xff] %vm848, %v847
        $region64: #{tpu_custom_call.1} parent=43 // pred_fallthru
          _
        %v850 = vld [vmem:[#allocation2] sm:$0xf]
        %v851 = vld [vmem:[%s319] sm:$0xff]
        %v852 = vld [vmem:[%s319 + $0x8] sm:$0xff]
        %v853 = vld [vmem:[%s319 + $0x10] sm:$0xff]
        %v854 = vld [vmem:[%s319 + $0x18] sm:$0xff]
        %v855 = vld [vmem:[%s319 + $0x20] sm:$0xff]
        %v856 = vld [vmem:[%s319 + $0x28] sm:$0xff]
        %v857 = vld [vmem:[%s319 + $0x30] sm:$0xff]
        %v858 = vld [vmem:[%s319 + $0x38] sm:$0xff]
        %v859 = vld [vmem:[%s319 + $0x40] sm:$0xff]
        %v860 = vld [vmem:[%s319 + $0x48] sm:$0xff]
        %v861 = vld [vmem:[%s319 + $0x50] sm:$0xff]
        %v862 = vld [vmem:[%s319 + $0x58] sm:$0xff]
        %v863 = vld [vmem:[%s319 + $0x60] sm:$0xff]
        %v864 = vld [vmem:[%s319 + $0x68] sm:$0xff]
        %v865 = vld [vmem:[%s319 + $0x70] sm:$0xff]
        %v866 = vld [vmem:[%s319 + $0x78] sm:$0xff]
        %v867 = vld [vmem:[%s328] sm:$0xff]
        %v869 = vlaneseq
        %v870 = vshrl.u32 %v869, 7
        %v871 = vsub.s32 0, %v870
        %v872 = vrot.slane %v867, %v871
        %v873 = vlaneseq
        %v874 = vshrl.u32 %v873, 7
        %v875 = vsub.s32 1, %v874
        %v876 = vrot.slane %v867, %v875
        %v877 = vlaneseq
        %v878 = vshrl.u32 %v877, 7
        %v879 = vsub.s32 2, %v878
        %v880 = vrot.slane %v867, %v879
        %v881 = vlaneseq
        %v882 = vshrl.u32 %v881, 7
        %v883 = vsub.s32 3, %v882
        %v884 = vrot.slane %v867, %v883
        %v885 = vlaneseq
        %v886 = vshrl.u32 %v885, 7
        %v887 = vsub.s32 4, %v886
        %v888 = vrot.slane %v867, %v887
        %v889 = vlaneseq
        %v890 = vshrl.u32 %v889, 7
        %v891 = vsub.s32 5, %v890
        %v892 = vrot.slane %v867, %v891
        %v893 = vlaneseq
        %v894 = vshrl.u32 %v893, 7
        %v895 = vsub.s32 6, %v894
        %v896 = vrot.slane %v867, %v895
        %v897 = vlaneseq
        %v898 = vshrl.u32 %v897, 7
        %v899 = vsub.s32 7, %v898
        %v900 = vrot.slane %v867, %v899
        %v925 = vunpack.c.l.b16 %v851
        %v926 = vunpack.c.h.b16 %v851
        %v927 = vunpack.c.l.b16 %v852
        %v928 = vunpack.c.h.b16 %v852
        %v929 = vunpack.c.l.b16 %v853
        %v930 = vunpack.c.h.b16 %v853
        %v931 = vunpack.c.l.b16 %v854
        %v932 = vunpack.c.h.b16 %v854
        %v933 = vunpack.c.l.b16 %v855
        %v934 = vunpack.c.h.b16 %v855
        %v935 = vunpack.c.l.b16 %v856
        %v936 = vunpack.c.h.b16 %v856
        %v937 = vunpack.c.l.b16 %v857
        %v938 = vunpack.c.h.b16 %v857
        %v939 = vunpack.c.l.b16 %v858
        %v940 = vunpack.c.h.b16 %v858
        %v941 = vunpack.c.l.b16 %v859
        %v942 = vunpack.c.h.b16 %v859
        %v943 = vunpack.c.l.b16 %v860
        %v944 = vunpack.c.h.b16 %v860
        %v945 = vunpack.c.l.b16 %v861
        %v946 = vunpack.c.h.b16 %v861
        %v947 = vunpack.c.l.b16 %v862
        %v948 = vunpack.c.h.b16 %v862
        %v949 = vunpack.c.l.b16 %v863
        %v950 = vunpack.c.h.b16 %v863
        %v951 = vunpack.c.l.b16 %v864
        %v952 = vunpack.c.h.b16 %v864
        %v953 = vunpack.c.l.b16 %v865
        %v954 = vunpack.c.h.b16 %v865
        %v955 = vunpack.c.l.b16 %v866
        %v956 = vunpack.c.h.b16 %v866
        %v957 = vpack.c.b16 %v933, %v925
        %v958 = vpack.c.b16 %v934, %v926
        %v959 = vpack.c.b16 %v935, %v927
        %v960 = vpack.c.b16 %v936, %v928
        %v961 = vpack.c.b16 %v937, %v929
        %v962 = vpack.c.b16 %v938, %v930
        %v963 = vpack.c.b16 %v939, %v931
        %v964 = vpack.c.b16 %v940, %v932
        %v965 = vpack.c.b16 %v949, %v941
        %v966 = vpack.c.b16 %v950, %v942
        %v967 = vpack.c.b16 %v951, %v943
        %v968 = vpack.c.b16 %v952, %v944
        %v969 = vpack.c.b16 %v953, %v945
        %v970 = vpack.c.b16 %v954, %v946
        %v971 = vpack.c.b16 %v955, %v947
        %v972 = vpack.c.b16 %v956, %v948
        %vm989 = vcmask 261120
        %v991 = vsel %vm989, %v850, 0
        %993 = vmatprep.subr.bf16.mxu0 %v958
        %994 = vmatpush1.bf16.msra.mxu0 %v957
        %995 = vmatprep.subr.bf16.mxu0 %v966
        %996 = vmatpush1.bf16.msra.mxu0 %v965
        %997 = vmatprep.subr.bf16.mxu0 0
        %998 = vmatpush1.bf16.msra.mxu0 0
        %999 = vmatprep.subr.bf16.mxu0 0
        %1000 = vmatpush1.bf16.msra.mxu0 0
        %1001 = vmatprep.subr.bf16.mxu0 0
        %1002 = vmatpush1.bf16.msra.mxu0 0
        %1003 = vmatprep.subr.bf16.mxu0 0
        %1004 = vmatpush1.bf16.msra.mxu0 0
        %1005 = vmatprep.subr.bf16.mxu0 0
        %1006 = vmatpush1.bf16.msra.mxu0 0
        %1007 = vmatprep.subr.bf16.mxu0 0
        %1008 = vmatpush1.bf16.msra.mxu0 0
        %1009 = vmatprep.subr.bf16.mxu0 0
        %1010 = vmatpush1.bf16.msra.mxu0 0
        %1011 = vmatprep.subr.bf16.mxu0 0
        %1012 = vmatpush1.bf16.msra.mxu0 0
        %1013 = vmatprep.subr.bf16.mxu0 0
        %1014 = vmatpush1.bf16.msra.mxu0 0
        %1015 = vmatprep.subr.bf16.mxu0 0
        %1016 = vmatpush1.bf16.msra.mxu0 0
        %1017 = vmatprep.subr.bf16.mxu0 0
        %1018 = vmatpush1.bf16.msra.mxu0 0
        %1019 = vmatprep.subr.bf16.mxu0 0
        %1020 = vmatpush1.bf16.msra.mxu0 0
        %1021 = vmatprep.subr.bf16.mxu0 0
        %1022 = vmatpush1.bf16.msra.mxu0 0
        %1023 = vmatprep.subr.bf16.mxu0 0
        %1024 = vmatpush1.bf16.msra.mxu0 0
        %1025 = vmatprep.mubr.bf16.mxu0 0
        %1026 = vmatmul.mubr.bf16.gmra.mrb[0].mxu0 %v991
        %v1027 = vpop.f32.mrb[0].mxu0
        %v1028 = vadd.f32 %v872, %v1027
        %v1029 = vpop.f32.mrb[0].mxu0
        %v1030 = vadd.f32 %v876, %v1029
        %v1031 = vpop.f32.mrb[0].mxu0
        %v1032 = vpop.f32.mrb[0].mxu0
        %1033 = vdwg.mxu0
        %1034 = vmatprep.subr.bf16.mxu0 %v960
        %1035 = vmatpush1.bf16.msra.mxu0 %v959
        %1036 = vmatprep.subr.bf16.mxu0 %v968
        %1037 = vmatpush1.bf16.msra.mxu0 %v967
        %1038 = vmatprep.subr.bf16.mxu0 0
        %1039 = vmatpush1.bf16.msra.mxu0 0
        %1040 = vmatprep.subr.bf16.mxu0 0
        %1041 = vmatpush1.bf16.msra.mxu0 0
        %1042 = vmatprep.subr.bf16.mxu0 0
        %1043 = vmatpush1.bf16.msra.mxu0 0
        %1044 = vmatprep.subr.bf16.mxu0 0
        %1045 = vmatpush1.bf16.msra.mxu0 0
        %1046 = vmatprep.subr.bf16.mxu0 0
        %1047 = vmatpush1.bf16.msra.mxu0 0
        %1048 = vmatprep.subr.bf16.mxu0 0
        %1049 = vmatpush1.bf16.msra.mxu0 0
        %1050 = vmatprep.subr.bf16.mxu0 0
        %1051 = vmatpush1.bf16.msra.mxu0 0
        %1052 = vmatprep.subr.bf16.mxu0 0
        %1053 = vmatpush1.bf16.msra.mxu0 0
        %1054 = vmatprep.subr.bf16.mxu0 0
        %1055 = vmatpush1.bf16.msra.mxu0 0
        %1056 = vmatprep.subr.bf16.mxu0 0
        %1057 = vmatpush1.bf16.msra.mxu0 0
        %1058 = vmatprep.subr.bf16.mxu0 0
        %1059 = vmatpush1.bf16.msra.mxu0 0
        %1060 = vmatprep.subr.bf16.mxu0 0
        %1061 = vmatpush1.bf16.msra.mxu0 0
        %1062 = vmatprep.subr.bf16.mxu0 0
        %1063 = vmatpush1.bf16.msra.mxu0 0
        %1064 = vmatprep.subr.bf16.mxu0 0
        %1065 = vmatpush1.bf16.msra.mxu0 0
        %1066 = vmatprep.mubr.bf16.mxu0 0
        %1067 = vmatmul.mubr.bf16.gmra.mrb[0].mxu0 %v991
        %v1068 = vpop.f32.mrb[0].mxu0
        %v1069 = vadd.f32 %v880, %v1068
        %v1070 = vpop.f32.mrb[0].mxu0
        %v1071 = vadd.f32 %v884, %v1070
        %v1072 = vpop.f32.mrb[0].mxu0
        %v1073 = vpop.f32.mrb[0].mxu0
        %1074 = vdwg.mxu0
        %1075 = vmatprep.subr.bf16.mxu0 %v962
        %1076 = vmatpush1.bf16.msra.mxu0 %v961
        %1077 = vmatprep.subr.bf16.mxu0 %v970
        %1078 = vmatpush1.bf16.msra.mxu0 %v969
        %1079 = vmatprep.subr.bf16.mxu0 0
        %1080 = vmatpush1.bf16.msra.mxu0 0
        %1081 = vmatprep.subr.bf16.mxu0 0
        %1082 = vmatpush1.bf16.msra.mxu0 0
        %1083 = vmatprep.subr.bf16.mxu0 0
        %1084 = vmatpush1.bf16.msra.mxu0 0
        %1085 = vmatprep.subr.bf16.mxu0 0
        %1086 = vmatpush1.bf16.msra.mxu0 0
        %1087 = vmatprep.subr.bf16.mxu0 0
        %1088 = vmatpush1.bf16.msra.mxu0 0
        %1089 = vmatprep.subr.bf16.mxu0 0
        %1090 = vmatpush1.bf16.msra.mxu0 0
        %1091 = vmatprep.subr.bf16.mxu0 0
        %1092 = vmatpush1.bf16.msra.mxu0 0
        %1093 = vmatprep.subr.bf16.mxu0 0
        %1094 = vmatpush1.bf16.msra.mxu0 0
        %1095 = vmatprep.subr.bf16.mxu0 0
        %1096 = vmatpush1.bf16.msra.mxu0 0
        %1097 = vmatprep.subr.bf16.mxu0 0
        %1098 = vmatpush1.bf16.msra.mxu0 0
        %1099 = vmatprep.subr.bf16.mxu0 0
        %1100 = vmatpush1.bf16.msra.mxu0 0
        %1101 = vmatprep.subr.bf16.mxu0 0
        %1102 = vmatpush1.bf16.msra.mxu0 0
        %1103 = vmatprep.subr.bf16.mxu0 0
        %1104 = vmatpush1.bf16.msra.mxu0 0
        %1105 = vmatprep.subr.bf16.mxu0 0
        %1106 = vmatpush1.bf16.msra.mxu0 0
        %1107 = vmatprep.mubr.bf16.mxu0 0
        %1108 = vmatmul.mubr.bf16.gmra.mrb[0].mxu0 %v991
        %v1109 = vpop.f32.mrb[0].mxu0
        %v1110 = vadd.f32 %v888, %v1109
        %v1111 = vpop.f32.mrb[0].mxu0
        %v1112 = vadd.f32 %v892, %v1111
        %v1113 = vpop.f32.mrb[0].mxu0
        %v1114 = vpop.f32.mrb[0].mxu0
        %1115 = vdwg.mxu0
        %1116 = vmatprep.subr.bf16.mxu0 %v964
        %1117 = vmatpush1.bf16.msra.mxu0 %v963
        %1118 = vmatprep.subr.bf16.mxu0 %v972
        %1119 = vmatpush1.bf16.msra.mxu0 %v971
        %1120 = vmatprep.subr.bf16.mxu0 0
        %1121 = vmatpush1.bf16.msra.mxu0 0
        %1122 = vmatprep.subr.bf16.mxu0 0
        %1123 = vmatpush1.bf16.msra.mxu0 0
        %1124 = vmatprep.subr.bf16.mxu0 0
        %1125 = vmatpush1.bf16.msra.mxu0 0
        %1126 = vmatprep.subr.bf16.mxu0 0
        %1127 = vmatpush1.bf16.msra.mxu0 0
        %1128 = vmatprep.subr.bf16.mxu0 0
        %1129 = vmatpush1.bf16.msra.mxu0 0
        %1130 = vmatprep.subr.bf16.mxu0 0
        %1131 = vmatpush1.bf16.msra.mxu0 0
        %1132 = vmatprep.subr.bf16.mxu0 0
        %1133 = vmatpush1.bf16.msra.mxu0 0
        %1134 = vmatprep.subr.bf16.mxu0 0
        %1135 = vmatpush1.bf16.msra.mxu0 0
        %1136 = vmatprep.subr.bf16.mxu0 0
        %1137 = vmatpush1.bf16.msra.mxu0 0
        %1138 = vmatprep.subr.bf16.mxu0 0
        %1139 = vmatpush1.bf16.msra.mxu0 0
        %1140 = vmatprep.subr.bf16.mxu0 0
        %1141 = vmatpush1.bf16.msra.mxu0 0
        %1142 = vmatprep.subr.bf16.mxu0 0
        %1143 = vmatpush1.bf16.msra.mxu0 0
        %1144 = vmatprep.subr.bf16.mxu0 0
        %1145 = vmatpush1.bf16.msra.mxu0 0
        %1146 = vmatprep.subr.bf16.mxu0 0
        %1147 = vmatpush1.bf16.msra.mxu0 0
        %1148 = vmatprep.mubr.bf16.mxu0 0
        %1149 = vmatmul.mubr.bf16.gmra.mrb[0].mxu0 %v991
        %v1150 = vpop.f32.mrb[0].mxu0
        %v1151 = vadd.f32 %v896, %v1150
        %v1152 = vpop.f32.mrb[0].mxu0
        %v1153 = vadd.f32 %v900, %v1152
        %v1154 = vpop.f32.mrb[0].mxu0
        %v1155 = vpop.f32.mrb[0].mxu0
        %1156 = vdwg.mxu0
        %v1157 = vmax.f32 %v1028, 0.0
        %v1158 = vmax.f32 %v1030, 0.0
        %v1159 = vmax.f32 %v1069, 0.0
        %v1160 = vmax.f32 %v1071, 0.0
        %v1161 = vmax.f32 %v1110, 0.0
        %v1162 = vmax.f32 %v1112, 0.0
        %v1163 = vmax.f32 %v1151, 0.0
        %v1164 = vmax.f32 %v1153, 0.0
        %v1165 = vld [vmem:[%s382] sm:$0xff]
        %v1166 = vld [vmem:[%s337] sm:$0xff]
        %v1168 = vlaneseq
        %v1169 = vshrl.u32 %v1168, 7
        %v1170 = vsub.s32 0, %v1169
        %v1171 = vrot.slane %v1166, %v1170
        %v1172 = vlaneseq
        %v1173 = vshrl.u32 %v1172, 7
        %v1174 = vsub.s32 1, %v1173
        %v1175 = vrot.slane %v1166, %v1174
        %v1176 = vlaneseq
        %v1177 = vshrl.u32 %v1176, 7
        %v1178 = vsub.s32 2, %v1177
        %v1179 = vrot.slane %v1166, %v1178
        %v1180 = vlaneseq
        %v1181 = vshrl.u32 %v1180, 7
        %v1182 = vsub.s32 3, %v1181
        %v1183 = vrot.slane %v1166, %v1182
        %v1184 = vlaneseq
        %v1185 = vshrl.u32 %v1184, 7
        %v1186 = vsub.s32 4, %v1185
        %v1187 = vrot.slane %v1166, %v1186
        %v1188 = vlaneseq
        %v1189 = vshrl.u32 %v1188, 7
        %v1190 = vsub.s32 5, %v1189
        %v1191 = vrot.slane %v1166, %v1190
        %v1192 = vlaneseq
        %v1193 = vshrl.u32 %v1192, 7
        %v1194 = vsub.s32 6, %v1193
        %v1195 = vrot.slane %v1166, %v1194
        %v1196 = vlaneseq
        %v1197 = vshrl.u32 %v1196, 7
        %v1198 = vsub.s32 7, %v1197
        %v1199 = vrot.slane %v1166, %v1198
        %v1208 = vmul.f32 %v1157, %v1171
        %v1209 = vmul.f32 %v1158, %v1175
        %v1210 = vmul.f32 %v1159, %v1179
        %v1211 = vmul.f32 %v1160, %v1183
        %v1212 = vmul.f32 %v1161, %v1187
        %v1213 = vmul.f32 %v1162, %v1191
        %v1214 = vmul.f32 %v1163, %v1195
        %v1215 = vmul.f32 %v1164, %v1199
        %v1216 = vadd.f32 %v1208, %v1209
        %v1217 = vadd.f32 %v1216, %v1210
        %v1218 = vadd.f32 %v1217, %v1211
        %v1219 = vadd.f32 %v1218, %v1212
        %v1220 = vadd.f32 %v1219, %v1213
        %v1221 = vadd.f32 %v1220, %v1214
        %v1222 = vadd.f32 %v1221, %v1215
        %1223 = vadd.xlane.f32.xlu0 %v1222
        %v1224 = vpop.xlane.xlu0 %1223
        %v1225 = vadd.f32 %v1165, %v1224
        %vm1226 = vcmask 7168
        %1227 = vst.msk [vmem:[%s382] sm:$0xff] %vm1226, %v1225
        %p1228 = scmp.lt.s32.totalorder %s29, 0
        %s1229 = scalar_select %p1228, %s29, 0
        %s1230 = smul.addr %s1229, 8
        %s1231 = scalar_lea.vmem %s6, %s1230
        // Predicated region
        $region65: #{tpu_custom_call.1} parent=43 // pred_check
          %p1232 = pneg %p201
        $region66: #{tpu_custom_call.1} parent=43 // pred_check_branch
          %1234 = sbr.rel (%p1232) target = $region68
        $region67: #{tpu_custom_call.1} parent=43 // pred_region
          _
        $region68: #{tpu_custom_call.1} parent=43 // pred_fallthru
          _
        // Predicated region
        $region69: #{tpu_custom_call.1} parent=43 // pred_check
          %p1235 = pneg %p201
        $region70: #{tpu_custom_call.1} parent=43 // pred_check_branch
          %1237 = sbr.rel (%p1235) target = $region72
        $region71: #{tpu_custom_call.1} parent=43 // pred_region
          %p1238 = scmp.lt.s32.totalorder %s29, 0
          %s1239 = scalar_select %p1238, %s29, 0
          %s1240 = smul.addr %s1239, 8
          %s1241 = scalar_lea.vmem %s6, %s1240
        $region72: #{tpu_custom_call.1} parent=43 // pred_fallthru
          _
      $region44: #{tpu_custom_call.1} parent=5 // pred_fallthru
        _
      %p1242 = scmp.le.s32.totalorder 2, %s20
      // Predicated region
      $region73: #{tpu_custom_call.1} parent=5 // pred_check
        %p1243 = pneg %p1242
      $region74: #{tpu_custom_call.1} parent=5 // pred_check_branch
        %1245 = sbr.rel (%p1243) target = $region76
      $region75: #{tpu_custom_call.1} parent=5 // pred_region
        %s1246 = ssub.s32 %s20, 2
      $region76: #{tpu_custom_call.1} parent=5 // pred_fallthru
        _
    $region6: #{tpu_custom_call.1} parent=1 // loop_footer
      %s24 = sadd.s32 1, %s20
    $region7: #{tpu_custom_call.1} parent=1 // loop_footer_branch
      %19 = sbr.rel target = $region3
    $region8: #{tpu_custom_call.1} parent=1 // loop_exit
      _
    %1247 = vsyncpa [#allocation5], 1
    %s1248 = scalar_lea.sflag [#allocation5], 1
    %1249 = vsyncpa %s1248, 1
    %1250 = vsyncpa [#allocation7], 1
    %s1251 = scalar_lea.sflag [#allocation7], 1
    %1252 = vsyncpa %s1251, 1
    %1253 = vsyncpa [#allocation10], 1
    %s1254 = scalar_lea.sflag [#allocation10], 1
    %1255 = vsyncpa %s1254, 1

</llo_original>
